<compile_context>
chip_gen: v6e
topology: v6e:2x2x1
jax: 0.10.0
libtpu: 0.0.40
codegen_flags: <defaults>
</compile_context>

<pallas_src>
import functools

import jax
import jax.numpy as jnp
from jax.experimental import pallas as pl
from jax.experimental.pallas import tpu as pltpu


# ----------------------------------------------------------------------------
# Fused single-pass kernel: pool -> FC -> sigmoid -> rescale on a batch slab.
# ----------------------------------------------------------------------------
def _se_fused_kernel(x_ref, w1t_ref, w2t_ref, o_ref, *, inv_hw):
    # x_ref  : (Bt, C, HW)  input slab, native dtype
    # w1t_ref: (C, Cr)      first Linear weight, transposed, f32
    # w2t_ref: (Cr, C)      second Linear weight, transposed, f32
    # o_ref  : (Bt, C, HW)
    # Global average pool over spatial lanes, f32 accumulation.
    y = jnp.sum(x_ref[...], axis=-1, dtype=jnp.float32) * inv_hw      # (Bt, C)

    # fc: Linear(C->Cr, no bias) -> ReLU -> Linear(Cr->C, no bias) -> Sigmoid
    h = jnp.maximum(
        jnp.dot(y, w1t_ref[...], preferred_element_type=jnp.float32), 0.0)
    s = jax.nn.sigmoid(
        jnp.dot(h, w2t_ref[...], preferred_element_type=jnp.float32))  # (Bt, C)

    # Channel-wise rescale in the input's native dtype; x_ref is re-read here
    # (not kept live across the FC section) so no second VMEM copy of the slab.
    o_ref[...] = (x_ref[...] * s[:, :, None].astype(x_ref.dtype)).astype(o_ref.dtype)


# ----------------------------------------------------------------------------
# Fallback pass 1: pooled sum over spatial tiles (f32 accumulator output).
# ----------------------------------------------------------------------------
def _pool_kernel(x_ref, psum_ref, *, hw, hwt):
    # x_ref: (1, C, HWt), psum_ref: (1, 1, C) f32, resident across the hw axis.
    j = pl.program_id(1)

    @pl.when(j == 0)
    def _():
        psum_ref[...] = jnp.zeros_like(psum_ref)

    # Mask out-of-range lanes of the (possibly ragged) last spatial tile.
    lane = jax.lax.broadcasted_iota(jnp.int32, x_ref.shape, 2)
    xs = jnp.where(j * hwt + lane < hw, x_ref[...].astype(jnp.float32), 0.0)
    psum_ref[...] += jnp.sum(xs, axis=-1)[:, None, :]


# ----------------------------------------------------------------------------
# Fallback pass 2: channel-wise rescale of spatial tiles by a precomputed gate.
# ----------------------------------------------------------------------------
def _scale_kernel(x_ref, g_ref, o_ref):
    # x_ref: (1, C, HWt), g_ref: (1, C, 1) (x's dtype), o_ref: (1, C, HWt)
    o_ref[...] = (x_ref[...] * g_ref[...]).astype(o_ref.dtype)


# ----------------------------------------------------------------------------
# Sizing helpers.
# ----------------------------------------------------------------------------
def _usable_vmem_bytes():
    """Per-TensorCore-safe VMEM budget.

    v7x has 64 MiB per TensorCore (vs 128 MiB on v5e/v6e) and get_tpu_info may
    report chip-level capacity, so never assume more than 64 MiB is usable.
    """
    cap = 64 * 1024 * 1024
    try:
        info = pltpu.get_tpu_info()
        cap = int(getattr(info, "vmem_capacity_bytes", cap))
    except Exception:
        pass
    return min(cap, 64 * 1024 * 1024)


def _pick_batch_tile(batch, per_elem_bytes, slab_cap_bytes,
                     target_steps=8, min_slab_bytes=1 << 20):
    """Batch tile for the fused path.

    Returns 0 when even a single batch element exceeds the slab budget (the
    caller then switches to the spatial-tiling two-pass fallback).  Otherwise:
      * slab (Bt elements) must fit slab_cap_bytes (VMEM hard cap),
      * prefer >= target_steps grid steps (>= 3-4 per TensorCore on v7x) so the
        BlockSpec pipeline can overlap DMA-in/DMA-out with compute,
      * prefer slabs >= ~1 MiB so per-step overhead / tiny DMAs don't dominate.
    """
    if per_elem_bytes > slab_cap_bytes:
        return 0
    bt_cap = min(batch, max(1, slab_cap_bytes // per_elem_bytes))
    bt_steps = max(1, batch // target_steps)
    bt_floor = min(bt_cap, pl.cdiv(min_slab_bytes, per_elem_bytes))
    return max(1, min(bt_cap, max(bt_steps, bt_floor)))


# ----------------------------------------------------------------------------
# Paths.
# ----------------------------------------------------------------------------
def _se_fused(x2, w1t, w2t, *, bt, hw, vmem_limit):
    B, C, HW = x2.shape
    Cr = w1t.shape[1]
    itemsize = jnp.dtype(x2.dtype).itemsize
    cost = pl.CostEstimate(
        flops=2 * B * C * HW + 4 * B * C * Cr,
        transcendentals=B * C,  # sigmoid
        bytes_accessed=2 * B * C * HW * itemsize
        + (w1t.size + w2t.size) * 4,
    )
    kernel = functools.partial(_se_fused_kernel, inv_hw=1.0 / hw)
    return pl.pallas_call(
        kernel,
        out_shape=jax.ShapeDtypeStruct((B, C, HW), x2.dtype),
        grid=(pl.cdiv(B, bt),),
        in_specs=[
            pl.BlockSpec((bt, C, HW), lambda b: (b, 0, 0)),   # batch-tiled slab
            pl.BlockSpec((C, Cr), lambda b: (0, 0)),          # resident weight 1
            pl.BlockSpec((Cr, C), lambda b: (0, 0)),          # resident weight 2
        ],
        out_specs=pl.BlockSpec((bt, C, HW), lambda b: (b, 0, 0)),
        compiler_params=pltpu.CompilerParams(
            dimension_semantics=("parallel",),
            vmem_limit_bytes=int(vmem_limit),
        ),
        cost_estimate=cost,
    )(x2, w1t, w2t)


def _se_two_pass(x2, w1t, w2t, *, hw, slab_cap_bytes, vmem_limit):
    """Spatial-tiling fallback: pooled-sum kernel + (tiny) JAX FC + rescale kernel."""
    B, C, HW = x2.shape
    itemsize = jnp.dtype(x2.dtype).itemsize

    # Lane-aligned spatial tile sized to the slab budget.
    hwt = max(128, (slab_cap_bytes // (C * itemsize)) // 128 * 128)
    hwt = min(hwt, HW)
    nhw = pl.cdiv(HW, hwt)

    psum = pl.pallas_call(
        functools.partial(_pool_kernel, hw=HW, hwt=hwt),
        out_shape=jax.ShapeDtypeStruct((B, 1, C), jnp.float32),
        grid=(B, nhw),
        in_specs=[pl.BlockSpec((1, C, hwt), lambda i, j: (i, 0, j))],
        out_specs=pl.BlockSpec((1, 1, C), lambda i, j: (i, 0, 0)),
        compiler_params=pltpu.CompilerParams(
            dimension_semantics=("parallel", "arbitrary"),
            vmem_limit_bytes=int(vmem_limit),
        ),
        cost_estimate=pl.CostEstimate(
            flops=B * C * HW, transcendentals=0,
            bytes_accessed=B * C * HW * itemsize + B * C * 4),
    )(x2)

    # Tiny FC + sigmoid on the pooled means (B*C elements) in plain JAX.
    y = psum.reshape(B, C) * (1.0 / hw)
    h = jnp.maximum(y @ w1t, 0.0)
    gate = jax.nn.sigmoid(h @ w2t).astype(x2.dtype)[:, :, None]      # (B, C, 1)

    out = pl.pallas_call(
        _scale_kernel,
        out_shape=jax.ShapeDtypeStruct((B, C, HW), x2.dtype),
        grid=(B, nhw),
        in_specs=[
            pl.BlockSpec((1, C, hwt), lambda i, j: (i, 0, j)),
            pl.BlockSpec((1, C, 1), lambda i, j: (i, 0, 0)),
        ],
        out_specs=pl.BlockSpec((1, C, hwt), lambda i, j: (i, 0, j)),
        compiler_params=pltpu.CompilerParams(
            dimension_semantics=("parallel", "parallel"),
            vmem_limit_bytes=int(vmem_limit),
        ),
        cost_estimate=pl.CostEstimate(
            flops=B * C * HW, transcendentals=0,
            bytes_accessed=2 * B * C * HW * itemsize),
    )(x2, gate)
    return out


# ----------------------------------------------------------------------------
# Public wrapper.
# ----------------------------------------------------------------------------
def se_block(x, w1, w2, *, slab_cap_bytes=None):
    """SEBlock forward.  x: (B, C, H, W) NCHW; w1: (C//r, C); w2: (C, C//r)."""
    B, C, H, W = x.shape
    HW = H * W
    itemsize = jnp.dtype(x.dtype).itemsize

    usable_vmem = _usable_vmem_bytes()
    if slab_cap_bytes is None:
        # in + out slabs, double-buffered -> 4x one slab live; leave headroom
        # for weights / Mosaic internal scratch (~16 MiB).
        slab_cap_bytes = max(2 << 20, (usable_vmem - (16 << 20)) // 4)

    # Small FC weights: transpose + cast to f32 once at the JAX level so the
    # kernel needs no in-kernel transpose/astype.
    w1t = jnp.transpose(w1).astype(jnp.float32)     # (C, Cr)
    w2t = jnp.transpose(w2).astype(jnp.float32)     # (Cr, C)

    x2 = x.reshape(B, C, HW)                        # no pad, no extra HBM pass
    per_elem_bytes = C * HW * itemsize
    bt = _pick_batch_tile(B, per_elem_bytes, slab_cap_bytes)

    if bt >= 1:
        out2 = _se_fused(x2, w1t, w2t, bt=bt, hw=HW, vmem_limit=usable_vmem)
    else:
        out2 = _se_two_pass(x2, w1t, w2t, hw=HW,
                            slab_cap_bytes=slab_cap_bytes,
                            vmem_limit=usable_vmem)
    return out2.reshape(B, C, H, W)


def se_block_ref(x, w1, w2):
    """Pure-JAX reference matching the PyTorch forward."""
    y = jnp.mean(x, axis=(2, 3))                    # (B, C)
    y = jnp.maximum(y @ w1.T, 0.0)                  # (B, C//r)
    y = jax.nn.sigmoid(y @ w2.T)                    # (B, C)
    return x * y[:, :, None, None]


if __name__ == "__main__":
    key = jax.random.PRNGKey(0)
    B, C, H, W = 2, 32, 16, 16
    reduction = 16
    Cr = C // reduction

    kx, k1, k2 = jax.random.split(key, 3)
    x = jax.random.normal(kx, (B, C, H, W), dtype=jnp.float32)
    # Deterministic init mimicking nn.Linear default U(-1/sqrt(in), 1/sqrt(in)).
    w1 = jax.random.uniform(k1, (Cr, C), minval=-1.0, maxval=1.0,
                            dtype=jnp.float32) / jnp.sqrt(C)
    w2 = jax.random.uniform(k2, (C, Cr), minval=-1.0, maxval=1.0,
                            dtype=jnp.float32) / jnp.sqrt(Cr)

    # 1) Fused single-pass path.
    out = jax.block_until_ready(se_block(x, w1, w2))
    ref = se_block_ref(x, w1, w2)
    assert out.shape == (B, C, H, W)
    assert jnp.allclose(out, ref, atol=1e-5, rtol=1e-5), "fused path mismatch"

    # 2) Fused path with a ragged batch tile (forced small slab cap -> Bt=2 over B=3).
    x3 = jax.random.normal(jax.random.PRNGKey(1), (3, C, H, W), dtype=jnp.float32)
    out3 = jax.block_until_ready(se_block(x3, w1, w2, slab_cap_bytes=64 * 1024))
    assert jnp.allclose(out3, se_block_ref(x3, w1, w2), atol=1e-5, rtol=1e-5), \
        "ragged-batch fused path mismatch"

    # 3) Spatial-tiling two-pass fallback (single element exceeds forced slab cap,
    #    HW=391 exercises the masked ragged spatial tail).
    x4 = jax.random.normal(jax.random.PRNGKey(2), (2, C, 17, 23), dtype=jnp.float32)
    out4 = jax.block_until_ready(se_block(x4, w1, w2, slab_cap_bytes=16 * 1024))
    assert jnp.allclose(out4, se_block_ref(x4, w1, w2), atol=1e-5, rtol=1e-5), \
        "spatial-fallback path mismatch"

    print("KERNEL_OK")
</pallas_src>

<mosaic_0001>
module attributes {stable_mosaic.version = 11 : i64} {
  func.func @_se_fused_kernel(%arg0: i32, %arg1: memref<2x32x256xf32, #tpu.memory_space<vmem>>, %arg2: memref<32x2xf32, #tpu.memory_space<vmem>>, %arg3: memref<2x32xf32, #tpu.memory_space<vmem>>, %arg4: memref<2x32x256xf32, #tpu.memory_space<vmem>>) attributes {dimension_semantics = [#tpu.dimension_semantics<parallel>], iteration_bounds = array<i64: 1>, scalar_prefetch = 0 : i64, scratch_operands = 0 : i64, tpu.core_type = #tpu.core_type<tc>, window_params = [{transform_indices = @transform_0, window_bounds = array<i64: 2, 32, 256>}, {pipeline_mode = #tpu.pipeline_mode<synchronous>, transform_indices = @transform_1, window_bounds = array<i64: 32, 2>}, {pipeline_mode = #tpu.pipeline_mode<synchronous>, transform_indices = @transform_2, window_bounds = array<i64: 2, 32>}, {transform_indices = @transform_3, window_bounds = array<i64: 2, 32, 256>}]} {
    %c0 = arith.constant 0 : index
    %c0_0 = arith.constant 0 : index
    %c0_1 = arith.constant 0 : index
    %0 = vector.load %arg1[%c0, %c0_0, %c0_1] : memref<2x32x256xf32, #tpu.memory_space<vmem>>, vector<2x32x256xf32>
    %cst = arith.constant dense<0.000000e+00> : vector<2x32xf32>
    %1 = vector.multi_reduction <add>, %0, %cst [2] : vector<2x32x256xf32> to vector<2x32xf32>
    %cst_2 = arith.constant 3.906250e-03 : f32
    %2 = vector.broadcast %cst_2 : f32 to vector<2x32xf32>
    %3 = arith.mulf %1, %2 : vector<2x32xf32>
    %c0_3 = arith.constant 0 : index
    %c0_4 = arith.constant 0 : index
    %4 = vector.load %arg2[%c0_3, %c0_4] : memref<32x2xf32, #tpu.memory_space<vmem>>, vector<32x2xf32>
    %cst_5 = arith.constant dense<0.000000e+00> : vector<2x2xf32>
    %5 = tpu.matmul %3, %4, %cst_5 {dimension_numbers = #tpu.dot_dimension_numbers<[1], [0], [0], [1], [0, 0, 1, 1], [], []>} : vector<2x32xf32>, vector<32x2xf32>, vector<2x2xf32> -> vector<2x2xf32>
    %cst_6 = arith.constant 0.000000e+00 : f32
    %6 = vector.broadcast %cst_6 : f32 to vector<2x2xf32>
    %7 = arith.maximumf %5, %6 : vector<2x2xf32>
    %c0_7 = arith.constant 0 : index
    %c0_8 = arith.constant 0 : index
    %8 = vector.load %arg3[%c0_7, %c0_8] : memref<2x32xf32, #tpu.memory_space<vmem>>, vector<2x32xf32>
    %cst_9 = arith.constant dense<0.000000e+00> : vector<2x32xf32>
    %9 = tpu.matmul %7, %8, %cst_9 {dimension_numbers = #tpu.dot_dimension_numbers<[1], [0], [0], [1], [0, 0, 1, 1], [], []>} : vector<2x2xf32>, vector<2x32xf32>, vector<2x32xf32> -> vector<2x32xf32>
    %10 = arith.negf %9 : vector<2x32xf32>
    %11 = math.exp %10 : vector<2x32xf32>
    %cst_10 = arith.constant 1.000000e+00 : f32
    %12 = vector.broadcast %cst_10 : f32 to vector<2x32xf32>
    %13 = arith.addf %12, %11 : vector<2x32xf32>
    %14 = arith.divf %12, %13 : vector<2x32xf32>
    %c0_11 = arith.constant 0 : index
    %c0_12 = arith.constant 0 : index
    %c0_13 = arith.constant 0 : index
    %15 = vector.load %arg1[%c0_11, %c0_12, %c0_13] : memref<2x32x256xf32, #tpu.memory_space<vmem>>, vector<2x32x256xf32>
    %16 = vector.shape_cast %14 : vector<2x32xf32> to vector<2x32x1xf32>
    %17 = vector.broadcast %16 : vector<2x32x1xf32> to vector<2x32x256xf32>
    %18 = arith.mulf %15, %17 : vector<2x32x256xf32>
    %c0_14 = arith.constant 0 : index
    %c0_15 = arith.constant 0 : index
    %c0_16 = arith.constant 0 : index
    %19 = vector.load %arg4[%c0_14, %c0_15, %c0_16] : memref<2x32x256xf32, #tpu.memory_space<vmem>>, vector<2x32x256xf32>
    tpu.vector_store %arg4[%c0_14, %c0_15, %c0_16], %18 {strides = array<i32>} : memref<2x32x256xf32, #tpu.memory_space<vmem>>, vector<2x32x256xf32>,
    return
  }
  func.func @transform_0(%arg0: i32) -> (i32, i32, i32) {
    %c0_i32 = arith.constant 0 : i32
    %c0_i32_0 = arith.constant 0 : i32
    %c0_i32_1 = arith.constant 0 : i32
    return %arg0, %c0_i32, %c0_i32_0 : i32, i32, i32
  }
  func.func @transform_1(%arg0: i32) -> (i32, i32) {
    %c0_i32 = arith.constant 0 : i32
    %c0_i32_0 = arith.constant 0 : i32
    %c0_i32_1 = arith.constant 0 : i32
    return %c0_i32, %c0_i32_0 : i32, i32
  }
  func.func @transform_2(%arg0: i32) -> (i32, i32) {
    %c0_i32 = arith.constant 0 : i32
    %c0_i32_0 = arith.constant 0 : i32
    %c0_i32_1 = arith.constant 0 : i32
    return %c0_i32, %c0_i32_0 : i32, i32
  }
  func.func @transform_3(%arg0: i32) -> (i32, i32, i32) {
    %c0_i32 = arith.constant 0 : i32
    %c0_i32_0 = arith.constant 0 : i32
    %c0_i32_1 = arith.constant 0 : i32
    return %arg0, %c0_i32, %c0_i32_0 : i32, i32, i32
  }
}

</mosaic_0001>

<llo_original>
// kernel: tpu_custom_call.1
$region0: #{tpu_custom_call.1}
  #allocation0 [shape = 'u32[]', space=smem, size = 0x4, offset = 0x4, fixed_abs, tag = 'smem constant byte address 0x4 - core index']
  #allocation1 [shape = 'u32[144,128]{1,0:T(1,128)}', space=vmem, size = 0x12000, scoped, tag = 'internal scratch']
  %s0 = inlined_call_operand.hbm [shape: f32[2,32,256], index: 0, kind: input, shape index: {}]
  %s1 = inlined_call_operand.vmem [shape: f32[32,2], index: 1, kind: input, shape index: {}]
  %s2 = inlined_call_operand.vmem [shape: f32[2,32], index: 2, kind: input, shape index: {}]
  %s3 = inlined_call_operand.hbm [shape: f32[2,32,256], index: 3, kind: output, shape index: {}]
  %s4 = sld [smem:[#allocation0]]
  $region26: #{tpu_custom_call.1} parent=0
    _
  %s6 = ssub.s32 1, %s4
  %s7 = scalar_select 0, %s6, %s4
  $region1: #{tpu_custom_call.1} parent=0
    #allocation2 [shape = 'u8[65536]{0}', space=vmem, size = 0x10000, scoped, tag = 'input window, operand 0, single buffered']
    #allocation3 [shape = 's32[1]{0}', space=sflag, size = 0x4, scoped, tag = 'scoped memory for tpu_custom_call.1']
    #allocation4 [shape = 's32[1]{0}', space=sflag, size = 0x4, scoped, tag = 'scoped memory for tpu_custom_call.1']
    #allocation5 [shape = 'u8[65536]{0}', space=vmem, size = 0x10000, scoped, tag = 'output window, operand 0, single buffered']
    %8 = vsyncpa [#allocation3], 0
    %9 = vsyncpa [#allocation4], 0
    // Predicated region
    $region2: #{tpu_custom_call.1} parent=1 // pred_check
      _
    $region3: #{tpu_custom_call.1} parent=1 // pred_check_branch
      %11 = sbr.rel (0) target = $region5
    $region4: #{tpu_custom_call.1} parent=1 // pred_region
      %s13 = ssub.s32 2048, 2048
      %14 = vsyncadd [#allocation3], %s13
      %s15 = sshll.u32 [#allocation2], 4
      %s16 = int_to_ptr.vmem [resolvable:$true] %s15
      %21 = dma.hbm_to_vmem [thread:$0]  %s0, 2048, %s16, [#allocation3], 256, 256, 16
    $region5: #{tpu_custom_call.1} parent=1 // pred_fallthru
      _
    // Predicated region
    $region6: #{tpu_custom_call.1} parent=1 // pred_check
      _
    $region7: #{tpu_custom_call.1} parent=1 // pred_check_branch
      %23 = sbr.rel (0) target = $region9
    $region8: #{tpu_custom_call.1} parent=1 // pred_region
      _
    $region9: #{tpu_custom_call.1} parent=1 // pred_fallthru
      _
    // Predicated region
    $region10: #{tpu_custom_call.1} parent=1 // pred_check
      _
    $region11: #{tpu_custom_call.1} parent=1 // pred_check_branch
      %25 = sbr.rel (0) target = $region13
    $region12: #{tpu_custom_call.1} parent=1 // pred_region
      _
    $region13: #{tpu_custom_call.1} parent=1 // pred_fallthru
      _
    // Predicated region
    $region14: #{tpu_custom_call.1} parent=1 // pred_check
      _
    $region15: #{tpu_custom_call.1} parent=1 // pred_check_branch
      %27 = sbr.rel (0) target = $region17
    $region16: #{tpu_custom_call.1} parent=1 // pred_region
      %28 = dma.done [#allocation3], 2048
    $region17: #{tpu_custom_call.1} parent=1 // pred_fallthru
      _
    %v29 = vld [vmem:[#allocation2] sm:$0xff]
    %v30 = vld [vmem:[#allocation2 + $0x8] sm:$0xff]
    %v31 = vld [vmem:[#allocation2 + $0x10] sm:$0xff]
    %v32 = vld [vmem:[#allocation2 + $0x18] sm:$0xff]
    %v33 = vld [vmem:[#allocation2 + $0x20] sm:$0xff]
    %v34 = vld [vmem:[#allocation2 + $0x28] sm:$0xff]
    %v35 = vld [vmem:[#allocation2 + $0x30] sm:$0xff]
    %v36 = vld [vmem:[#allocation2 + $0x38] sm:$0xff]
    %v37 = vld [vmem:[#allocation2 + $0x40] sm:$0xff]
    %v38 = vld [vmem:[#allocation2 + $0x48] sm:$0xff]
    %v39 = vld [vmem:[#allocation2 + $0x50] sm:$0xff]
    %v40 = vld [vmem:[#allocation2 + $0x58] sm:$0xff]
    %v41 = vld [vmem:[#allocation2 + $0x60] sm:$0xff]
    %v42 = vld [vmem:[#allocation2 + $0x68] sm:$0xff]
    %v43 = vld [vmem:[#allocation2 + $0x70] sm:$0xff]
    %v44 = vld [vmem:[#allocation2 + $0x78] sm:$0xff]
    %v45 = vadd.f32 %v29, %v30
    %46 = vadd.xlane.f32.xlu0 %v45
    %v47 = vpop.xlane.xlu0 %46
    %v48 = vadd.f32 %v31, %v32
    %49 = vadd.xlane.f32.xlu0 %v48
    %v50 = vpop.xlane.xlu0 %49
    %v51 = vadd.f32 %v33, %v34
    %52 = vadd.xlane.f32.xlu0 %v51
    %v53 = vpop.xlane.xlu0 %52
    %v54 = vadd.f32 %v35, %v36
    %55 = vadd.xlane.f32.xlu0 %v54
    %v56 = vpop.xlane.xlu0 %55
    %v57 = vadd.f32 %v37, %v38
    %58 = vadd.xlane.f32.xlu0 %v57
    %v59 = vpop.xlane.xlu0 %58
    %v60 = vadd.f32 %v39, %v40
    %61 = vadd.xlane.f32.xlu0 %v60
    %v62 = vpop.xlane.xlu0 %61
    %v63 = vadd.f32 %v41, %v42
    %64 = vadd.xlane.f32.xlu0 %v63
    %v65 = vpop.xlane.xlu0 %64
    %v66 = vadd.f32 %v43, %v44
    %67 = vadd.xlane.f32.xlu0 %v66
    %v68 = vpop.xlane.xlu0 %67
    %v69 = vmul.f32 %v47, 0.00390625
    %v70 = vmul.f32 %v50, 0.00390625
    %v71 = vmul.f32 %v53, 0.00390625
    %v72 = vmul.f32 %v56, 0.00390625
    %v73 = vmul.f32 %v59, 0.00390625
    %v74 = vmul.f32 %v62, 0.00390625
    %v75 = vmul.f32 %v65, 0.00390625
    %v76 = vmul.f32 %v68, 0.00390625
    %v77 = vld [vmem:[%s1] sm:$0xff]
    %v78 = vld [vmem:[%s1 + $0x8] sm:$0xff]
    %v79 = vld [vmem:[%s1 + $0x10] sm:$0xff]
    %v80 = vld [vmem:[%s1 + $0x18] sm:$0xff]
    %v89 = vlaneseq
    %v90 = vand.u32 %v89, 127
    %v91 = vlaneseq
    %v92 = vshrl.u32 %v91, 7
    %v93 = vsub.s32 %v90, %v92
    %v94 = vrot.slane %v69, %v93
    %v95 = vadd.s32 %v90, 4294967288
    %v96 = vlaneseq
    %v97 = vshrl.u32 %v96, 7
    %v98 = vsub.s32 %v95, %v97
    %v99 = vrot.slane %v70, %v98
    %vm100 = vcmask 130112
    %v101 = vsel %vm100, %v99, %v94
    %v102 = vadd.s32 %v90, 4294967280
    %v103 = vlaneseq
    %v104 = vshrl.u32 %v103, 7
    %v105 = vsub.s32 %v102, %v104
    %v106 = vrot.slane %v71, %v105
    %vm107 = vcmask 195712
    %v108 = vsel %vm107, %v106, %v101
    %v109 = vadd.s32 %v90, 4294967272
    %v110 = vlaneseq
    %v111 = vshrl.u32 %v110, 7
    %v112 = vsub.s32 %v109, %v111
    %v113 = vrot.slane %v72, %v112
    %vm114 = vcmask 261312
    %v115 = vsel %vm114, %v113, %v108
    %v116 = vlaneseq
    %v117 = vshrl.u32 %v116, 7
    %v118 = vsub.s32 %v90, %v117
    %v119 = vrot.slane %v73, %v118
    %v120 = vlaneseq
    %v121 = vshrl.u32 %v120, 7
    %v122 = vsub.s32 %v95, %v121
    %v123 = vrot.slane %v74, %v122
    %v124 = vsel %vm100, %v123, %v119
    %v125 = vlaneseq
    %v126 = vshrl.u32 %v125, 7
    %v127 = vsub.s32 %v102, %v126
    %v128 = vrot.slane %v75, %v127
    %v129 = vsel %vm107, %v128, %v124
    %v130 = vlaneseq
    %v131 = vshrl.u32 %v130, 7
    %v132 = vsub.s32 %v109, %v131
    %v133 = vrot.slane %v76, %v132
    %v134 = vsel %vm114, %v133, %v129
    %vm135 = vcmask 1041409
    %v136 = vsel %vm135, %v134, %v115
    %vm137 = vcmask 261120
    %v138 = vsel %vm137, %v136, 0
    %140 = vmatprep.subr.mxu0 0.0
    %141 = vmatpush1.msra.mxu0 0.0
    %142 = vmatprep.subr.mxu0 0.0
    %143 = vmatpush1.msra.mxu0 0.0
    %144 = vmatprep.subr.mxu0 0.0
    %145 = vmatpush1.msra.mxu0 0.0
    %146 = vmatprep.subr.mxu0 0.0
    %147 = vmatpush1.msra.mxu0 0.0
    %148 = vmatprep.subr.mxu0 0.0
    %149 = vmatpush1.msra.mxu0 0.0
    %150 = vmatprep.subr.mxu0 0.0
    %151 = vmatpush1.msra.mxu0 0.0
    %152 = vmatprep.subr.mxu0 0.0
    %153 = vmatpush1.msra.mxu0 0.0
    %154 = vmatprep.subr.mxu0 0.0
    %155 = vmatpush1.msra.mxu0 0.0
    %156 = vmatprep.subr.mxu0 0.0
    %157 = vmatpush1.msra.mxu0 0.0
    %158 = vmatprep.subr.mxu0 0.0
    %159 = vmatpush1.msra.mxu0 0.0
    %160 = vmatprep.subr.mxu0 0.0
    %161 = vmatpush1.msra.mxu0 0.0
    %162 = vmatprep.subr.mxu0 0.0
    %163 = vmatpush1.msra.mxu0 0.0
    %164 = vmatprep.subr.mxu0 0.0
    %165 = vmatpush1.msra.mxu0 %v80
    %166 = vmatprep.subr.mxu0 0.0
    %167 = vmatpush1.msra.mxu0 %v79
    %168 = vmatprep.subr.mxu0 0.0
    %169 = vmatpush1.msra.mxu0 %v78
    %170 = vmatprep.subr.mxu0 0.0
    %171 = vmatpush1.msra.mxu0 %v77
    %172 = vmatprep.subr.mxu0 0.0
    %173 = vmatpush2.msra.mxu0 0.0
    %174 = vmatprep.subr.mxu0 0.0
    %175 = vmatpush2.msra.mxu0 0.0
    %176 = vmatprep.subr.mxu0 0.0
    %177 = vmatpush2.msra.mxu0 0.0
    %178 = vmatprep.subr.mxu0 0.0
    %179 = vmatpush2.msra.mxu0 0.0
    %180 = vmatprep.subr.mxu0 0.0
    %181 = vmatpush2.msra.mxu0 0.0
    %182 = vmatprep.subr.mxu0 0.0
    %183 = vmatpush2.msra.mxu0 0.0
    %184 = vmatprep.subr.mxu0 0.0
    %185 = vmatpush2.msra.mxu0 0.0
    %186 = vmatprep.subr.mxu0 0.0
    %187 = vmatpush2.msra.mxu0 0.0
    %188 = vmatprep.subr.mxu0 0.0
    %189 = vmatpush2.msra.mxu0 0.0
    %190 = vmatprep.subr.mxu0 0.0
    %191 = vmatpush2.msra.mxu0 0.0
    %192 = vmatprep.subr.mxu0 0.0
    %193 = vmatpush2.msra.mxu0 0.0
    %194 = vmatprep.subr.mxu0 0.0
    %195 = vmatpush2.msra.mxu0 0.0
    %196 = vmatprep.subr.mxu0 0.0
    %197 = vmatpush2.msra.mxu0 0.0
    %198 = vmatprep.subr.mxu0 0.0
    %199 = vmatpush2.msra.mxu0 0.0
    %200 = vmatprep.subr.mxu0 0.0
    %201 = vmatpush2.msra.mxu0 0.0
    %202 = vmatprep.subr.mxu0 0.0
    %203 = vmatpush2.msra.mxu0 0.0
    %204 = vmatprep.mubr.f32.mxu0 0.0
    %205 = vmatmul.mubr.f32.gmra.mxu0 %v138
    %v206 = vpop.f32.mrf.mxu0
    %v207 = vadd.f32 0.0, %v206
    %v208 = vpop.f32.mrf.mxu0
    %209 = vdwg.mxu0
    %v210 = vmax.f32 %v207, 0.0
    %v211 = vld [vmem:[%s2] sm:$0x3]
    %vm212 = vcmask 15360
    %v214 = vsel %vm212, %v210, 0
    %vm216 = vcmask 1041408
    %v218 = vsel %vm216, %v211, 0
    %220 = vmatprep.subr.mxu0 0.0
    %221 = vmatpush1.msra.mxu0 0.0
    %222 = vmatprep.subr.mxu0 0.0
    %223 = vmatpush1.msra.mxu0 0.0
    %224 = vmatprep.subr.mxu0 0.0
    %225 = vmatpush1.msra.mxu0 0.0
    %226 = vmatprep.subr.mxu0 0.0
    %227 = vmatpush1.msra.mxu0 0.0
    %228 = vmatprep.subr.mxu0 0.0
    %229 = vmatpush1.msra.mxu0 0.0
    %230 = vmatprep.subr.mxu0 0.0
    %231 = vmatpush1.msra.mxu0 0.0
    %232 = vmatprep.subr.mxu0 0.0
    %233 = vmatpush1.msra.mxu0 0.0
    %234 = vmatprep.subr.mxu0 0.0
    %235 = vmatpush1.msra.mxu0 0.0
    %236 = vmatprep.subr.mxu0 0.0
    %237 = vmatpush1.msra.mxu0 0.0
    %238 = vmatprep.subr.mxu0 0.0
    %239 = vmatpush1.msra.mxu0 0.0
    %240 = vmatprep.subr.mxu0 0.0
    %241 = vmatpush1.msra.mxu0 0.0
    %242 = vmatprep.subr.mxu0 0.0
    %243 = vmatpush1.msra.mxu0 0.0
    %244 = vmatprep.subr.mxu0 0.0
    %245 = vmatpush1.msra.mxu0 0.0
    %246 = vmatprep.subr.mxu0 0.0
    %247 = vmatpush1.msra.mxu0 0.0
    %248 = vmatprep.subr.mxu0 0.0
    %249 = vmatpush1.msra.mxu0 0.0
    %250 = vmatprep.subr.mxu0 0.0
    %251 = vmatpush1.msra.mxu0 %v218
    %252 = vmatprep.subr.mxu0 0.0
    %253 = vmatpush2.msra.mxu0 0.0
    %254 = vmatprep.subr.mxu0 0.0
    %255 = vmatpush2.msra.mxu0 0.0
    %256 = vmatprep.subr.mxu0 0.0
    %257 = vmatpush2.msra.mxu0 0.0
    %258 = vmatprep.subr.mxu0 0.0
    %259 = vmatpush2.msra.mxu0 0.0
    %260 = vmatprep.subr.mxu0 0.0
    %261 = vmatpush2.msra.mxu0 0.0
    %262 = vmatprep.subr.mxu0 0.0
    %263 = vmatpush2.msra.mxu0 0.0
    %264 = vmatprep.subr.mxu0 0.0
    %265 = vmatpush2.msra.mxu0 0.0
    %266 = vmatprep.subr.mxu0 0.0
    %267 = vmatpush2.msra.mxu0 0.0
    %268 = vmatprep.subr.mxu0 0.0
    %269 = vmatpush2.msra.mxu0 0.0
    %270 = vmatprep.subr.mxu0 0.0
    %271 = vmatpush2.msra.mxu0 0.0
    %272 = vmatprep.subr.mxu0 0.0
    %273 = vmatpush2.msra.mxu0 0.0
    %274 = vmatprep.subr.mxu0 0.0
    %275 = vmatpush2.msra.mxu0 0.0
    %276 = vmatprep.subr.mxu0 0.0
    %277 = vmatpush2.msra.mxu0 0.0
    %278 = vmatprep.subr.mxu0 0.0
    %279 = vmatpush2.msra.mxu0 0.0
    %280 = vmatprep.subr.mxu0 0.0
    %281 = vmatpush2.msra.mxu0 0.0
    %282 = vmatprep.subr.mxu0 0.0
    %283 = vmatpush2.msra.mxu0 0.0
    %284 = vmatprep.mubr.f32.mxu0 0.0
    %285 = vmatmul.mubr.f32.gmra.mxu0 %v214
    %v286 = vpop.f32.mrf.mxu0
    %v287 = vadd.f32 0.0, %v286
    %v288 = vpop.f32.mrf.mxu0
    %289 = vdwg.mxu0
    %v290 = vxor.u32 %v287, 2147483648
    %v291 = vmul.f32 %v290, 1.442695
    %v292 = vpow.pop %v291
    %v293 = vadd.f32 %v292, 1.0
    %v294 = vrcp.pop %v293
    %v295 = vmul.f32 1.0, %v294
    %v296 = vlaneseq
    %v297 = vshrl.u32 %v296, 7
    %v298 = vsub.s32 0, %v297
    %v299 = vrot.slane %v295, %v298
    %301 = vbcast.lane.b32.xlu0 %v299, 256
    %v302 = vpop.permute.xlu0 %301
    %s304 = sor.u32 256, 8
    %305 = vbcast.lane.b32.xlu0 %v299, %s304
    %v306 = vpop.permute.xlu0 %305
    %s308 = sor.u32 256, 16
    %309 = vbcast.lane.b32.xlu0 %v299, %s308
    %v310 = vpop.permute.xlu0 %309
    %s312 = sor.u32 256, 24
    %313 = vbcast.lane.b32.xlu0 %v299, %s312
    %v314 = vpop.permute.xlu0 %313
    %v315 = vlaneseq
    %v316 = vshrl.u32 %v315, 7
    %v317 = vsub.s32 1, %v316
    %v318 = vrot.slane %v295, %v317
    %320 = vbcast.lane.b32.xlu0 %v318, 256
    %v321 = vpop.permute.xlu0 %320
    %s323 = sor.u32 256, 8
    %324 = vbcast.lane.b32.xlu0 %v318, %s323
    %v325 = vpop.permute.xlu0 %324
    %s327 = sor.u32 256, 16
    %328 = vbcast.lane.b32.xlu0 %v318, %s327
    %v329 = vpop.permute.xlu0 %328
    %s331 = sor.u32 256, 24
    %332 = vbcast.lane.b32.xlu0 %v318, %s331
    %v333 = vpop.permute.xlu0 %332
    %v334 = vmul.f32 %v29, %v302
    %v335 = vmul.f32 %v30, %v302
    %v336 = vmul.f32 %v31, %v306
    %v337 = vmul.f32 %v32, %v306
    %v338 = vmul.f32 %v33, %v310
    %v339 = vmul.f32 %v34, %v310
    %v340 = vmul.f32 %v35, %v314
    %v341 = vmul.f32 %v36, %v314
    %v342 = vmul.f32 %v37, %v321
    %v343 = vmul.f32 %v38, %v321
    %v344 = vmul.f32 %v39, %v325
    %v345 = vmul.f32 %v40, %v325
    %v346 = vmul.f32 %v41, %v329
    %v347 = vmul.f32 %v42, %v329
    %v348 = vmul.f32 %v43, %v333
    %v349 = vmul.f32 %v44, %v333
    %350 = vst [vmem:[#allocation5] sm:$0xff] %v334
    %351 = vst [vmem:[#allocation5 + $0x8] sm:$0xff] %v335
    %352 = vst [vmem:[#allocation5 + $0x10] sm:$0xff] %v336
    %353 = vst [vmem:[#allocation5 + $0x18] sm:$0xff] %v337
    %354 = vst [vmem:[#allocation5 + $0x20] sm:$0xff] %v338
    %355 = vst [vmem:[#allocation5 + $0x28] sm:$0xff] %v339
    %356 = vst [vmem:[#allocation5 + $0x30] sm:$0xff] %v340
    %357 = vst [vmem:[#allocation5 + $0x38] sm:$0xff] %v341
    %358 = vst [vmem:[#allocation5 + $0x40] sm:$0xff] %v342
    %359 = vst [vmem:[#allocation5 + $0x48] sm:$0xff] %v343
    %360 = vst [vmem:[#allocation5 + $0x50] sm:$0xff] %v344
    %361 = vst [vmem:[#allocation5 + $0x58] sm:$0xff] %v345
    %362 = vst [vmem:[#allocation5 + $0x60] sm:$0xff] %v346
    %363 = vst [vmem:[#allocation5 + $0x68] sm:$0xff] %v347
    %364 = vst [vmem:[#allocation5 + $0x70] sm:$0xff] %v348
    %365 = vst [vmem:[#allocation5 + $0x78] sm:$0xff] %v349
    // Predicated region
    $region18: #{tpu_custom_call.1} parent=1 // pred_check
      _
    $region19: #{tpu_custom_call.1} parent=1 // pred_check_branch
      %367 = sbr.rel (0) target = $region21
    $region20: #{tpu_custom_call.1} parent=1 // pred_region
      %s369 = ssub.s32 2048, 2048
      %370 = vsyncadd [#allocation4], %s369
      %s371 = sshll.u32 [#allocation5], 4
      %s372 = int_to_ptr.vmem [resolvable:$true] %s371
      %377 = dma.vmem_to_hbm [thread:$0]  %s372, 2048, %s3, [#allocation4], 256, 256, 16
    $region21: #{tpu_custom_call.1} parent=1 // pred_fallthru
      _
    // Predicated region
    $region22: #{tpu_custom_call.1} parent=1 // pred_check
      _
    $region23: #{tpu_custom_call.1} parent=1 // pred_check_branch
      %379 = sbr.rel (0) target = $region25
    $region24: #{tpu_custom_call.1} parent=1 // pred_region
      %380 = dma.done [#allocation4], 2048
    $region25: #{tpu_custom_call.1} parent=1 // pred_fallthru
      _
    %381 = vsyncpa [#allocation3], 1
    %382 = vsyncpa [#allocation4], 1

</llo_original>
